<compile_context>
chip_gen: v6e
topology: v6e:2x2x1
jax: 0.10.0
libtpu: 0.0.40
codegen_flags: <defaults>
</compile_context>

<pallas_src>
import jax
import jax.numpy as jnp
from jax import lax
from jax.experimental import pallas as pl
from jax.experimental.pallas import tpu as pltpu

_SUBLANE = 8
_LANE = 128
_TB_CAP = 2048              # max batch rows per block (review: raised from 512)
_BLOCK_BYTES_CAP = 4 << 20  # keep one output block <= 4 MiB
_MIDSIZE_B = 128            # >= this: split batch over >=2 "parallel" blocks (v7x megacore)


def _round_up(x, m):
    return ((x + m - 1) // m) * m


def _cdiv(a, b):
    return (a + b - 1) // b


def _make_blend_kernel(half_dim):
    # Generic path (half_dim not lane-aligned): freq duplicated across the
    # padded width, ONE lane-dense full-width store.  The cos-mask comes from
    # an in-kernel lane iota (no mask DMA); the blend is a single vsel.
    def kernel(t_ref, freq_ref, out_ref):
        phase = t_ref[...] * freq_ref[...]                      # (tb, dim_pad)
        lane = lax.broadcasted_iota(jnp.int32, phase.shape, 1)
        out_ref[...] = jnp.where(lane >= half_dim, jnp.cos(phase), jnp.sin(phase))
    return kernel


def _make_split_kernel(half_dim):
    # Lane-aligned path (half_dim % 128 == 0): compute the phase once over
    # half the width, then two unmasked lane-aligned stores.  Halves EUP/VALU
    # work vs. the full-width blend while keeping stores lane-dense.
    def kernel(t_ref, freq_ref, out_ref):
        phase = t_ref[...] * freq_ref[...]                      # (tb, half_dim)
        out_ref[:, :half_dim] = jnp.sin(phase)
        out_ref[:, half_dim:] = jnp.cos(phase)
    return kernel


def sinusoidal_embedding(t, dim):
    """t: (B,) or (B, 1) -> (B, 2 * (dim // 2)) float32, matching the torch module."""
    assert dim >= 2, "dim must be >= 2"
    t = jnp.asarray(t, jnp.float32)
    if t.ndim == 1:
        t = t[:, None]
    B = t.shape[0]
    half_dim = dim // 2
    out_dim = 2 * half_dim                         # torch.cat width (== dim if even)

    # freq table computed once in the wrapper; kept as a kernel input so the
    # high-frequency columns match the reference bit-for-bit (in-kernel
    # exp(e*ln 1e4) reconstruction would shift the phase by ~1 rad at t~1e3).
    exp = jnp.linspace(0.0, 1.0, half_dim, dtype=jnp.float32)
    freq = jnp.power(10000.0, exp)                 # positive exponent, as in module

    split = (half_dim % _LANE == 0)
    if split:
        dim_pad = out_dim                          # already a multiple of 128
        freq_tab = freq[None, :]                   # (1, half_dim)
        kernel = _make_split_kernel(half_dim)
    else:
        dim_pad = max(_LANE, _round_up(out_dim, _LANE))
        freq_dup = jnp.concatenate([freq, freq])   # [freq | freq]
        freq_tab = jnp.pad(freq_dup, (0, dim_pad - out_dim))[None, :]  # (1, dim_pad)
        kernel = _make_blend_kernel(half_dim)
    freq_w = freq_tab.shape[1]

    # Batch tiling: un-gridded for tiny B; >=2 "parallel" blocks for mid/large
    # B (balanced block size, capped so one output block <= 4 MiB).
    tb_cap = min(_TB_CAP,
                 max(256, (_BLOCK_BYTES_CAP // (dim_pad * 4)) // _SUBLANE * _SUBLANE))
    if B < _MIDSIZE_B:
        grid_b = 1
        tb = _round_up(B, _SUBLANE)
    else:
        grid_b = max(2, _cdiv(B, tb_cap))
        tb = _round_up(_cdiv(B, grid_b), _SUBLANE)
    b_pad = grid_b * tb

    t_in = t[:, :1]
    if b_pad != B:
        t_in = jnp.pad(t_in, ((0, b_pad - B), (0, 0)))   # single pad op, no zeros+scatter

    out_shape = jax.ShapeDtypeStruct((b_pad, dim_pad), jnp.float32)

    if grid_b == 1:
        # No grid, no per-step pipeline bookkeeping: whole arrays live in VMEM.
        out_p = pl.pallas_call(kernel, out_shape=out_shape)(t_in, freq_tab)
    else:
        # Tile only the batch axis; last axis stays whole and lane-dense.
        out_p = pl.pallas_call(
            kernel,
            out_shape=out_shape,
            grid=(grid_b,),
            in_specs=[
                pl.BlockSpec((tb, 1), lambda i: (i, 0)),
                pl.BlockSpec((1, freq_w), lambda i: (0, 0)),
            ],
            out_specs=pl.BlockSpec((tb, dim_pad), lambda i: (i, 0)),
            compiler_params=pltpu.CompilerParams(
                dimension_semantics=("parallel",)),
        )(t_in, freq_tab)

    # Skip the post-kernel slice (an extra HBM round-trip) when nothing was padded.
    if b_pad == B and dim_pad == out_dim:
        return out_p
    return out_p[:B, :out_dim]


def _reference(t, dim):
    t = jnp.asarray(t, jnp.float32)
    if t.ndim == 1:
        t = t[:, None]
    half_dim = dim // 2
    exp = jnp.linspace(0.0, 1.0, half_dim, dtype=jnp.float32)
    freq = jnp.power(10000.0, exp)
    phase = t * freq[None, :]
    return jnp.concatenate([jnp.sin(phase), jnp.cos(phase)], axis=-1)


if __name__ == "__main__":
    key = jax.random.PRNGKey(0)

    cases = [
        (8, 32),      # tiny diffusion shape: un-gridded, mask-in-kernel blend path
        (8, 256),     # half_dim == 128: un-gridded, two lane-aligned stores (split path)
        (300, 33),    # odd dim, mid-size B: 2-block "parallel" grid (v7x megacore)
        (4500, 64),   # large B: balanced multi-block tiled path
    ]
    for idx, (B, dim) in enumerate(cases):
        k = jax.random.fold_in(key, idx)
        t = jax.random.uniform(k, (B, 1), dtype=jnp.float32,
                               minval=0.0, maxval=1000.0)
        out = jax.block_until_ready(sinusoidal_embedding(t, dim))
        ref = _reference(t, dim)
        assert out.shape == (B, 2 * (dim // 2)), (out.shape, B, dim)
        assert jnp.allclose(out, ref, atol=1e-5, rtol=1e-5), f"mismatch (B={B}, dim={dim})"

    print("KERNEL_OK")
</pallas_src>

<mosaic_0001>
module attributes {stable_mosaic.version = 11 : i64} {
  func.func @kernel(%arg0: memref<8x1xf32, #tpu.memory_space<vmem>>, %arg1: memref<1x128xf32, #tpu.memory_space<vmem>>, %arg2: memref<8x128xf32, #tpu.memory_space<vmem>>) attributes {dimension_semantics = [], scalar_prefetch = 0 : i64, scratch_operands = 0 : i64, tpu.core_type = #tpu.core_type<tc>} {
    %c0 = arith.constant 0 : index
    %c0_0 = arith.constant 0 : index
    %0 = vector.load %arg0[%c0, %c0_0] : memref<8x1xf32, #tpu.memory_space<vmem>>, vector<8x1xf32>
    %c0_1 = arith.constant 0 : index
    %c0_2 = arith.constant 0 : index
    %1 = vector.load %arg1[%c0_1, %c0_2] : memref<1x128xf32, #tpu.memory_space<vmem>>, vector<1x128xf32>
    %2 = vector.broadcast %0 : vector<8x1xf32> to vector<8x128xf32>
    %3 = vector.broadcast %1 : vector<1x128xf32> to vector<8x128xf32>
    %4 = arith.mulf %2, %3 : vector<8x128xf32>
    %5 = tpu.iota {dimensions = array<i32: 1>} : vector<8x128xi32>
    %c16_i32 = arith.constant 16 : i32
    %6 = vector.broadcast %c16_i32 : i32 to vector<8x128xi32>
    %7 = arith.cmpi sge, %5, %6 : vector<8x128xi32>
    %8 = math.cos %4 : vector<8x128xf32>
    %9 = math.sin %4 : vector<8x128xf32>
    %10 = arith.select %7, %8, %9 : vector<8x128xi1>, vector<8x128xf32>
    %c0_3 = arith.constant 0 : index
    %c0_4 = arith.constant 0 : index
    %11 = vector.load %arg2[%c0_3, %c0_4] : memref<8x128xf32, #tpu.memory_space<vmem>>, vector<8x128xf32>
    tpu.vector_store %arg2[%c0_3, %c0_4], %10 {strides = array<i32>} : memref<8x128xf32, #tpu.memory_space<vmem>>, vector<8x128xf32>,
    return
  }
}

</mosaic_0001>

<llo_original>
// kernel: tpu_custom_call.1
$region0: #{tpu_custom_call.1}
  #allocation0 [shape = 'u32[]', space=smem, size = 0x4, offset = 0x4, fixed_abs, tag = 'smem constant byte address 0x4 - core index']
  #allocation1 [shape = 'u32[144,128]{1,0:T(1,128)}', space=vmem, size = 0x12000, scoped, tag = 'internal scratch']
  %s0 = inlined_call_operand.vmem [shape: f32[8,1], index: 0, kind: input, shape index: {}]
  %s1 = inlined_call_operand.vmem [shape: f32[1,128], index: 1, kind: input, shape index: {}]
  %s2 = inlined_call_operand.hbm [shape: f32[8,128], index: 2, kind: output, shape index: {}]
  %s3 = sld [smem:[#allocation0]]
  $region18: #{tpu_custom_call.1} parent=0
    _
  %s5 = ssub.s32 1, %s3
  %s6 = scalar_select 0, %s5, %s3
  $region1: #{tpu_custom_call.1} parent=0
    #allocation2 [shape = 'u8[4096]{0}', space=vmem, size = 0x1000, scoped, tag = 'output window, operand 0, single buffered']
    #allocation3 [shape = 's32[1]{0}', space=sflag, size = 0x4, scoped, tag = 'scoped memory for tpu_custom_call.1']
    %7 = vsyncpa [#allocation3], 0
    // Predicated region
    $region2: #{tpu_custom_call.1} parent=1 // pred_check
      _
    $region3: #{tpu_custom_call.1} parent=1 // pred_check_branch
      %9 = sbr.rel (0) target = $region5
    $region4: #{tpu_custom_call.1} parent=1 // pred_region
      _
    $region5: #{tpu_custom_call.1} parent=1 // pred_fallthru
      _
    // Predicated region
    $region6: #{tpu_custom_call.1} parent=1 // pred_check
      _
    $region7: #{tpu_custom_call.1} parent=1 // pred_check_branch
      %11 = sbr.rel (0) target = $region9
    $region8: #{tpu_custom_call.1} parent=1 // pred_region
      _
    $region9: #{tpu_custom_call.1} parent=1 // pred_fallthru
      _
    %v12 = vld [vmem:[%s0] sm:$0xff]
    %v13 = vld [vmem:[%s1] sm:$0x1]
    %15 = vset.pattern.permute.xlu0 0
    %16 = vperm.xlu0 %15, %v12
    %v17 = vpop.permute.xlu0 %16
    %v20 = vlaneseq
    %v21 = vshrl.u32 %v20, 7
    %v22 = vsub.s32 0, %v21
    %v23 = vrot.slane %v13, %v22
    %v25 = vmul.f32 %v17, %v23
    %v26 = vlaneseq
    %v27 = vand.u32 %v26, 127
    %vm28 = vcmp.ge.s32.totalorder %v27, 16
    %v29 = vand.u32 2147483647, %v25
    %vm30 = vcmp.le.f32.partialorder %v29, 0.7853982
    %vm31 = vcmp.lt.s32.totalorder %v25, 0
    %v32 = vand.u32 %v25, 2139095040
    %v33 = vshrl.u32 %v32, 23
    %v34 = vsub.s32 %v33, 127
    %v35 = vand.u32 2147483647, %v25
    %v36 = vand.u32 %v35, 8388607
    %v37 = vor.u32 %v36, 8388608
    %v38 = vsub.s32 0, %v37
    %v39 = vadd.s32 %v34, 1
    %vm40 = vcmp.gt.s32.totalorder %v39, 0
    %v41 = vsel %vm40, %v39, 0
    %v42 = vshrl.u32 %v41, 5
    %v43 = vand.u32 %v41, 31
    %v44 = vsub.s32 32, %v43
    %v45 = vshrl.u32 683565275, %v44
    %v46 = vshll.u32 683565275, %v43
    %v47 = vshrl.u32 2475754826, %v44
    %v48 = vor.u32 %v46, %v47
    %v49 = vshll.u32 2475754826, %v43
    %v50 = vshrl.u32 2131351028, %v44
    %v51 = vor.u32 %v49, %v50
    %v52 = vshll.u32 2131351028, %v43
    %v53 = vshrl.u32 2102212464, %v44
    %v54 = vor.u32 %v52, %v53
    %v55 = vshll.u32 2102212464, %v43
    %v56 = vshrl.u32 920167782, %v44
    %v57 = vor.u32 %v55, %v56
    %v58 = vshll.u32 920167782, %v43
    %v59 = vshrl.u32 1326507024, %v44
    %v60 = vor.u32 %v58, %v59
    %vm61 = vcmp.lt.s32.totalorder %v42, 1
    %vm62 = vcmp.lt.s32.totalorder %v42, 2
    %vm63 = vcmp.lt.s32.totalorder %v42, 3
    %vm64 = vcmp.lt.s32.totalorder %v42, 4
    %v65 = vsel %vm61, %v45, %v48
    %v66 = vsel %vm64, %v54, 2102212464
    %v67 = vsel %vm63, %v51, %v66
    %v68 = vsel %vm62, %v65, %v67
    %v69 = vsel %vm61, %v48, %v51
    %v70 = vsel %vm64, %v57, 920167782
    %v71 = vsel %vm63, %v54, %v70
    %v72 = vsel %vm62, %v69, %v71
    %v73 = vsel %vm61, %v51, %v54
    %v74 = vsel %vm64, %v60, 1326507024
    %v75 = vsel %vm63, %v57, %v74
    %v76 = vsel %vm62, %v73, %v75
    %v77 = vshll.u32 %v37, 8
    %v78 = vmul.u32.u64.compose %v77, %v76
    %v79 = vextract.low.u32 %v78
    %v80 = vextract.high.u32 %v78
    %v81 = vmul.u32.u64.compose %v77, %v72
    %v82 = vextract.low.u32 %v81
    %v83 = vextract.high.u32 %v81
    %v84 = vmul.u32 %v77, %v68
    %v85 = vadd.s32 %v80, %v82
    %vm86 = vc.u32 %v80, %v82
    %v87 = vadd.s32 %v83, 1
    %v88 = vsel %vm86, %v87, %v83
    %v89 = vadd.s32 %v84, %v88
    %v90 = vadd.s32 %v89, 536870912
    %v91 = vshrl.u32 %v90, 30
    %v92 = vshll.u32 %v91, 30
    %v93 = vsub.s32 %v89, %v92
    %vm94 = vcmp.lt.s32.totalorder %v93, 0
    %v95 = vsub.s32 0, %v93
    %v96 = vsel %vm94, %v95, %v93
    %v97 = vclz %v96
    %v98 = vsub.s32 %v97, 2
    %vm99 = vcmp.gt.s32.totalorder 0, %v98
    %v100 = vsel %vm99, 0, %v98
    %v101 = vsub.s32 32, %v100
    %v102 = vshll.u32 %v93, %v100
    %v103 = vshrl.u32 %v85, %v101
    %v104 = vor.u32 %v102, %v103
    %v105 = vsub.s32 4294967266, %v100
    %v106 = vadd.s32 %v105, 127
    %v107 = vshll.u32 %v106, 23
    %v108 = vor.u32 4788187, %v107
    %v109 = vand.u32 2147483647, %v108
    %v111 = vcvt.s32.f32 %v104
    %v112 = vmul.f32 %v111, %v109
    %v113 = vxor.u32 %v112, 2147483648
    %v114 = vsel %vm31, %v113, %v112
    %v115 = vsub.s32 4, %v91
    %v116 = vsel %vm31, %v115, %v91
    %v117 = vsel %vm30, %v25, %v114
    %v118 = vsel %vm30, 0, %v116
    %v119 = vcosq.f32.pop %v117
    %v120 = vsinq.f32.pop %v117
    %vm121 = vweird.f32 %v25
    %v122 = vand.u32 %v118, 3
    %vm123 = vcmp.lt.s32.totalorder %v122, 2
    %vm124 = vcmp.eq.s32.totalorder %v122, 0
    %v125 = vxor.u32 %v120, 2147483648
    %v126 = vsel %vm124, %v119, %v125
    %vm127 = vcmp.eq.s32.totalorder %v122, 2
    %v128 = vxor.u32 %v119, 2147483648
    %v129 = vsel %vm127, %v128, %v120
    %v130 = vsel %vm123, %v126, %v129
    %v131 = vsel %vm121, nan, %v130
    %v132 = vand.u32 2147483647, %v25
    %vm133 = vcmp.le.f32.partialorder %v132, 0.7853982
    %vm134 = vcmp.lt.s32.totalorder %v25, 0
    %v135 = vand.u32 %v25, 2139095040
    %v136 = vshrl.u32 %v135, 23
    %v137 = vsub.s32 %v136, 127
    %v138 = vand.u32 2147483647, %v25
    %v139 = vand.u32 %v138, 8388607
    %v140 = vor.u32 %v139, 8388608
    %v141 = vsub.s32 0, %v140
    %v142 = vadd.s32 %v137, 1
    %vm143 = vcmp.gt.s32.totalorder %v142, 0
    %v144 = vsel %vm143, %v142, 0
    %v145 = vshrl.u32 %v144, 5
    %v146 = vand.u32 %v144, 31
    %v147 = vsub.s32 32, %v146
    %v148 = vshrl.u32 683565275, %v147
    %v149 = vshll.u32 683565275, %v146
    %v150 = vshrl.u32 2475754826, %v147
    %v151 = vor.u32 %v149, %v150
    %v152 = vshll.u32 2475754826, %v146
    %v153 = vshrl.u32 2131351028, %v147
    %v154 = vor.u32 %v152, %v153
    %v155 = vshll.u32 2131351028, %v146
    %v156 = vshrl.u32 2102212464, %v147
    %v157 = vor.u32 %v155, %v156
    %v158 = vshll.u32 2102212464, %v146
    %v159 = vshrl.u32 920167782, %v147
    %v160 = vor.u32 %v158, %v159
    %v161 = vshll.u32 920167782, %v146
    %v162 = vshrl.u32 1326507024, %v147
    %v163 = vor.u32 %v161, %v162
    %vm164 = vcmp.lt.s32.totalorder %v145, 1
    %vm165 = vcmp.lt.s32.totalorder %v145, 2
    %vm166 = vcmp.lt.s32.totalorder %v145, 3
    %vm167 = vcmp.lt.s32.totalorder %v145, 4
    %v168 = vsel %vm164, %v148, %v151
    %v169 = vsel %vm167, %v157, 2102212464
    %v170 = vsel %vm166, %v154, %v169
    %v171 = vsel %vm165, %v168, %v170
    %v172 = vsel %vm164, %v151, %v154
    %v173 = vsel %vm167, %v160, 920167782
    %v174 = vsel %vm166, %v157, %v173
    %v175 = vsel %vm165, %v172, %v174
    %v176 = vsel %vm164, %v154, %v157
    %v177 = vsel %vm167, %v163, 1326507024
    %v178 = vsel %vm166, %v160, %v177
    %v179 = vsel %vm165, %v176, %v178
    %v180 = vshll.u32 %v140, 8
    %v181 = vmul.u32.u64.compose %v180, %v179
    %v182 = vextract.low.u32 %v181
    %v183 = vextract.high.u32 %v181
    %v184 = vmul.u32.u64.compose %v180, %v175
    %v185 = vextract.low.u32 %v184
    %v186 = vextract.high.u32 %v184
    %v187 = vmul.u32 %v180, %v171
    %v188 = vadd.s32 %v183, %v185
    %vm189 = vc.u32 %v183, %v185
    %v190 = vadd.s32 %v186, 1
    %v191 = vsel %vm189, %v190, %v186
    %v192 = vadd.s32 %v187, %v191
    %v193 = vadd.s32 %v192, 536870912
    %v194 = vshrl.u32 %v193, 30
    %v195 = vshll.u32 %v194, 30
    %v196 = vsub.s32 %v192, %v195
    %vm197 = vcmp.lt.s32.totalorder %v196, 0
    %v198 = vsub.s32 0, %v196
    %v199 = vsel %vm197, %v198, %v196
    %v200 = vclz %v199
    %v201 = vsub.s32 %v200, 2
    %vm202 = vcmp.gt.s32.totalorder 0, %v201
    %v203 = vsel %vm202, 0, %v201
    %v204 = vsub.s32 32, %v203
    %v205 = vshll.u32 %v196, %v203
    %v206 = vshrl.u32 %v188, %v204
    %v207 = vor.u32 %v205, %v206
    %v208 = vsub.s32 4294967266, %v203
    %v209 = vadd.s32 %v208, 127
    %v210 = vshll.u32 %v209, 23
    %v211 = vor.u32 4788187, %v210
    %v212 = vand.u32 2147483647, %v211
    %v214 = vcvt.s32.f32 %v207
    %v215 = vmul.f32 %v214, %v212
    %v216 = vxor.u32 %v215, 2147483648
    %v217 = vsel %vm134, %v216, %v215
    %v218 = vsub.s32 4, %v194
    %v219 = vsel %vm134, %v218, %v194
    %v220 = vsel %vm133, %v25, %v217
    %v221 = vsel %vm133, 0, %v219
    %v222 = vcosq.f32.pop %v220
    %v223 = vsinq.f32.pop %v220
    %vm224 = vweird.f32 %v25
    %v225 = vadd.s32 %v221, 3
    %v226 = vand.u32 %v225, 3
    %vm227 = vcmp.lt.s32.totalorder %v226, 2
    %vm228 = vcmp.eq.s32.totalorder %v226, 0
    %v229 = vxor.u32 %v223, 2147483648
    %v230 = vsel %vm228, %v222, %v229
    %vm231 = vcmp.eq.s32.totalorder %v226, 2
    %v232 = vxor.u32 %v222, 2147483648
    %v233 = vsel %vm231, %v232, %v223
    %v234 = vsel %vm227, %v230, %v233
    %v235 = vsel %vm224, nan, %v234
    %v236 = vsel %vm28, %v131, %v235
    %237 = vst [vmem:[#allocation2] sm:$0xff] %v236
    // Predicated region
    $region10: #{tpu_custom_call.1} parent=1 // pred_check
      _
    $region11: #{tpu_custom_call.1} parent=1 // pred_check_branch
      %239 = sbr.rel (0) target = $region13
    $region12: #{tpu_custom_call.1} parent=1 // pred_region
      %s241 = ssub.s32 128, 128
      %242 = vsyncadd [#allocation3], %s241
      %s244 = sshll.u32 [#allocation2], 4
      %s245 = int_to_ptr.vmem [resolvable:$true] %s244
      %247 = dma.vmem_to_hbm [thread:$0]  %s245, 128, %s2, [#allocation3]
    $region13: #{tpu_custom_call.1} parent=1 // pred_fallthru
      _
    // Predicated region
    $region14: #{tpu_custom_call.1} parent=1 // pred_check
      _
    $region15: #{tpu_custom_call.1} parent=1 // pred_check_branch
      %249 = sbr.rel (0) target = $region17
    $region16: #{tpu_custom_call.1} parent=1 // pred_region
      %250 = dma.done [#allocation3], 128
    $region17: #{tpu_custom_call.1} parent=1 // pred_fallthru
      _
    %251 = vsyncpa [#allocation3], 1

</llo_original>
